<compile_context>
chip_gen: v5e
topology: v5e:2x2
jax: 0.10.0
libtpu: 0.0.40
codegen_flags: <defaults>
</compile_context>

<pallas_src>
import functools

import jax
import jax.numpy as jnp
from jax.experimental import pallas as pl
from jax.experimental.pallas import tpu as pltpu


def _fc_eval_kernel(x_ref, w_ref, b_ref, o_ref):
    # x: (tb, D) f32, w: (D, Cp) f32, b: (1, Cp) f32, o: (tb, Cp) f32
    o_ref[...] = (
        jnp.dot(x_ref[...], w_ref[...], preferred_element_type=jnp.float32)
        + b_ref[...]
    )


def _fc_dropout_kernel(bits_ref, x_ref, w_ref, b_ref, o_ref, *, threshold, scale):
    # Inverted dropout: keep with prob (1-p), scale kept values by 1/(1-p).
    # bits are uniform uint32; keep iff bits >= threshold (= p * 2^32).
    keep_scale = jnp.where(
        bits_ref[...] >= jnp.uint32(threshold),
        jnp.float32(scale),
        jnp.float32(0.0),
    )
    x = x_ref[...] * keep_scale
    o_ref[...] = (
        jnp.dot(x, w_ref[...], preferred_element_type=jnp.float32) + b_ref[...]
    )


def feature_predict(x, w, b, *, use_dropout, dropout_p=0.3, rng_key=None):
    """x: (B, D) f32, w: (D, C) f32 (transposed PyTorch weight), b: (C,) f32."""
    B, D = x.shape
    C = w.shape[1]
    assert 0.0 <= float(dropout_p) < 1.0, "dropout_p must be in [0, 1)"

    LANE = 128
    C_pad = ((C + LANE - 1) // LANE) * LANE  # lane-dense output width

    x = x.astype(jnp.float32)
    w_pad = jnp.zeros((D, C_pad), jnp.float32).at[:, :C].set(w.astype(jnp.float32))
    b_pad = jnp.zeros((1, C_pad), jnp.float32).at[0, :C].set(b.astype(jnp.float32))

    # Batch tiling: single block for small B, tiled (pipelined / TC-parallel)
    # for large B.  W and bias are reused across batch tiles.
    tb = B
    for cand in (512, 256, 128):
        if B > cand and B % cand == 0:
            tb = cand
            break
    grid = (B // tb,)

    x_spec = pl.BlockSpec((tb, D), lambda i: (i, 0))
    w_spec = pl.BlockSpec((D, C_pad), lambda i: (0, 0))
    b_spec = pl.BlockSpec((1, C_pad), lambda i: (0, 0))
    o_spec = pl.BlockSpec((tb, C_pad), lambda i: (i, 0))
    cparams = pltpu.CompilerParams(dimension_semantics=("parallel",))
    out_shape = jax.ShapeDtypeStruct((B, C_pad), jnp.float32)

    if use_dropout:
        if rng_key is None:
            rng_key = jax.random.PRNGKey(0)
        # One uint32 per element of x, generated once for the full (B, D)
        # array, so tiles never see correlated masks.
        bits = jax.random.bits(rng_key, (B, D), dtype=jnp.uint32)
        threshold = min(int(round(float(dropout_p) * 2.0**32)), 2**32 - 1)
        scale = 1.0 / (1.0 - float(dropout_p))
        kernel = functools.partial(
            _fc_dropout_kernel, threshold=threshold, scale=scale
        )
        out_pad = pl.pallas_call(
            kernel,
            out_shape=out_shape,
            grid=grid,
            in_specs=[
                pl.BlockSpec((tb, D), lambda i: (i, 0)),  # random bits
                x_spec,
                w_spec,
                b_spec,
            ],
            out_specs=o_spec,
            compiler_params=cparams,
        )(bits, x, w_pad, b_pad)
    else:
        out_pad = pl.pallas_call(
            _fc_eval_kernel,
            out_shape=out_shape,
            grid=grid,
            in_specs=[x_spec, w_spec, b_spec],
            out_specs=o_spec,
            compiler_params=cparams,
        )(x, w_pad, b_pad)

    return out_pad[:, :C]


if __name__ == "__main__":
    key = jax.random.PRNGKey(0)
    k_x, k_w, k_b, k_drop = jax.random.split(key, 4)

    B = 8      # batch
    D = 256    # global_feature_layer_dim
    C = 16     # num_classes
    P = 0.3    # dropout prob

    x = jax.random.normal(k_x, (B, D), dtype=jnp.float32)
    bound = 1.0 / jnp.sqrt(D)
    # PyTorch stores Linear weight as (C, D); we keep the transposed (D, C).
    w = jax.random.uniform(k_w, (D, C), dtype=jnp.float32, minval=-bound, maxval=bound)
    b = jax.random.uniform(k_b, (C,), dtype=jnp.float32, minval=-bound, maxval=bound)

    # --- eval path (use_dropout=False): exact check vs plain JAX ---
    out_eval = feature_predict(x, w, b, use_dropout=False, dropout_p=P)
    out_eval = jax.block_until_ready(out_eval)
    ref_eval = x @ w + b
    assert out_eval.shape == (B, C)
    assert jnp.allclose(out_eval, ref_eval, atol=1e-4, rtol=1e-4), "fc mismatch"

    # --- training path (use_dropout=True): check vs reference using the same bits ---
    out_train = feature_predict(x, w, b, use_dropout=True, dropout_p=P, rng_key=k_drop)
    out_train = jax.block_until_ready(out_train)
    bits_ref = jax.random.bits(k_drop, (B, D), dtype=jnp.uint32)
    thr = jnp.uint32(min(int(round(P * 2.0**32)), 2**32 - 1))
    keep = (bits_ref >= thr).astype(jnp.float32)
    ref_train = (x * keep * (1.0 / (1.0 - P))) @ w + b
    assert out_train.shape == (B, C)
    assert jnp.allclose(out_train, ref_train, atol=1e-4, rtol=1e-4), "dropout mismatch"

    print("KERNEL_OK")
</pallas_src>

<mosaic_0001>
module attributes {stable_mosaic.version = 11 : i64} {
  func.func @_fc_eval_kernel(%arg0: i32, %arg1: memref<8x256xf32, #tpu.memory_space<vmem>>, %arg2: memref<256x128xf32, #tpu.memory_space<vmem>>, %arg3: memref<1x128xf32, #tpu.memory_space<vmem>>, %arg4: memref<8x128xf32, #tpu.memory_space<vmem>>) attributes {dimension_semantics = [#tpu.dimension_semantics<parallel>], iteration_bounds = array<i64: 1>, scalar_prefetch = 0 : i64, scratch_operands = 0 : i64, tpu.core_type = #tpu.core_type<tc>, window_params = [{transform_indices = @transform_0, window_bounds = array<i64: 8, 256>}, {pipeline_mode = #tpu.pipeline_mode<synchronous>, transform_indices = @transform_1, window_bounds = array<i64: 256, 128>}, {pipeline_mode = #tpu.pipeline_mode<synchronous>, transform_indices = @transform_2, window_bounds = array<i64: 1, 128>}, {transform_indices = @transform_3, window_bounds = array<i64: 8, 128>}]} {
    %c0 = arith.constant 0 : index
    %c0_0 = arith.constant 0 : index
    %0 = vector.load %arg1[%c0, %c0_0] : memref<8x256xf32, #tpu.memory_space<vmem>>, vector<8x256xf32>
    %c0_1 = arith.constant 0 : index
    %c0_2 = arith.constant 0 : index
    %1 = vector.load %arg2[%c0_1, %c0_2] : memref<256x128xf32, #tpu.memory_space<vmem>>, vector<256x128xf32>
    %cst = arith.constant dense<0.000000e+00> : vector<8x128xf32>
    %2 = tpu.matmul %0, %1, %cst {dimension_numbers = #tpu.dot_dimension_numbers<[1], [0], [0], [1], [0, 0, 1, 1], [], []>} : vector<8x256xf32>, vector<256x128xf32>, vector<8x128xf32> -> vector<8x128xf32>
    %c0_3 = arith.constant 0 : index
    %c0_4 = arith.constant 0 : index
    %3 = vector.load %arg3[%c0_3, %c0_4] : memref<1x128xf32, #tpu.memory_space<vmem>>, vector<1x128xf32>
    %4 = vector.broadcast %3 : vector<1x128xf32> to vector<8x128xf32>
    %5 = arith.addf %2, %4 : vector<8x128xf32>
    %c0_5 = arith.constant 0 : index
    %c0_6 = arith.constant 0 : index
    %6 = vector.load %arg4[%c0_5, %c0_6] : memref<8x128xf32, #tpu.memory_space<vmem>>, vector<8x128xf32>
    tpu.vector_store %arg4[%c0_5, %c0_6], %5 {strides = array<i32>} : memref<8x128xf32, #tpu.memory_space<vmem>>, vector<8x128xf32>,
    return
  }
  func.func @transform_0(%arg0: i32) -> (i32, i32) {
    %c0_i32 = arith.constant 0 : i32
    %c0_i32_0 = arith.constant 0 : i32
    return %arg0, %c0_i32 : i32, i32
  }
  func.func @transform_1(%arg0: i32) -> (i32, i32) {
    %c0_i32 = arith.constant 0 : i32
    %c0_i32_0 = arith.constant 0 : i32
    %c0_i32_1 = arith.constant 0 : i32
    return %c0_i32, %c0_i32_0 : i32, i32
  }
  func.func @transform_2(%arg0: i32) -> (i32, i32) {
    %c0_i32 = arith.constant 0 : i32
    %c0_i32_0 = arith.constant 0 : i32
    %c0_i32_1 = arith.constant 0 : i32
    return %c0_i32, %c0_i32_0 : i32, i32
  }
  func.func @transform_3(%arg0: i32) -> (i32, i32) {
    %c0_i32 = arith.constant 0 : i32
    %c0_i32_0 = arith.constant 0 : i32
    return %arg0, %c0_i32 : i32, i32
  }
}

</mosaic_0001>

<llo_original>
// kernel: tpu_custom_call.1
$region0: #{tpu_custom_call.1}
  #allocation0 [shape = 'u32[]', space=smem, size = 0x4, offset = 0x4, fixed_abs, tag = 'smem constant byte address 0x4 - core index']
  #allocation1 [shape = 'u32[72,128]{1,0:T(1,128)}', space=vmem, size = 0x9000, scoped, tag = 'internal scratch']
  %s0 = inlined_call_operand.hbm [shape: f32[8,256], index: 0, kind: input, shape index: {}]
  %s1 = inlined_call_operand.hbm [shape: f32[256,128], index: 1, kind: input, shape index: {}]
  %s2 = inlined_call_operand.vmem [shape: f32[1,128], index: 2, kind: input, shape index: {}]
  %s3 = inlined_call_operand.hbm [shape: f32[8,128], index: 3, kind: output, shape index: {}]
  %s4 = sld [smem:[#allocation0]]
  $region30: #{tpu_custom_call.1} parent=0
    _
  %s6 = ssub.s32 1, %s4
  %s7 = scalar_select 0, %s6, %s4
  $region1: #{tpu_custom_call.1} parent=0
    #allocation2 [shape = 'u8[8192]{0}', space=vmem, size = 0x2000, scoped, tag = 'input window, operand 0, single buffered']
    #allocation3 [shape = 's32[1]{0}', space=sflag, size = 0x4, scoped, tag = 'scoped memory for tpu_custom_call.1']
    #allocation4 [shape = 's32[1]{0}', space=sflag, size = 0x4, scoped, tag = 'scoped memory for tpu_custom_call.1']
    #allocation5 [shape = 'u8[131072]{0}', space=vmem, size = 0x20000, scoped, tag = 'input window, operand 1, single buffered']
    #allocation6 [shape = 's32[1]{0}', space=sflag, size = 0x4, scoped, tag = 'scoped memory for tpu_custom_call.1']
    #allocation7 [shape = 'u8[4096]{0}', space=vmem, size = 0x1000, scoped, tag = 'output window, operand 0, single buffered']
    %8 = vsyncpa [#allocation3], 0
    %9 = vsyncpa [#allocation6], 0
    %10 = vsyncpa [#allocation4], 0
    // Predicated region
    $region2: #{tpu_custom_call.1} parent=1 // pred_check
      _
    $region3: #{tpu_custom_call.1} parent=1 // pred_check_branch
      %12 = sbr.rel (0) target = $region5
    $region4: #{tpu_custom_call.1} parent=1 // pred_region
      %14 = vsyncadd [#allocation3], 0
      %s16 = sshll.u32 %s0, 4
      %s17 = int_to_ptr.hbm [resolvable:$true] %s16
      %s18 = sshll.u32 [#allocation2], 4
      %s19 = int_to_ptr.vmem [resolvable:$true] %s18
      %21 = dma.hbm_to_vmem [thread:$0]  %s17, 256, %s19, [#allocation3]
    $region5: #{tpu_custom_call.1} parent=1 // pred_fallthru
      _
    // Predicated region
    $region6: #{tpu_custom_call.1} parent=1 // pred_check
      _
    $region7: #{tpu_custom_call.1} parent=1 // pred_check_branch
      %23 = sbr.rel (0) target = $region9
    $region8: #{tpu_custom_call.1} parent=1 // pred_region
      %25 = vsyncadd [#allocation6], 0
      %s26 = sshll.u32 %s1, 4
      %s27 = int_to_ptr.hbm [resolvable:$true] %s26
      %s28 = sshll.u32 [#allocation5], 4
      %s29 = int_to_ptr.vmem [resolvable:$true] %s28
      %34 = dma.hbm_to_vmem [thread:$0]  %s27, 4096, %s29, [#allocation6], 128, 128, 8
    $region9: #{tpu_custom_call.1} parent=1 // pred_fallthru
      _
    // Predicated region
    $region10: #{tpu_custom_call.1} parent=1 // pred_check
      _
    $region11: #{tpu_custom_call.1} parent=1 // pred_check_branch
      %36 = sbr.rel (0) target = $region13
    $region12: #{tpu_custom_call.1} parent=1 // pred_region
      _
    $region13: #{tpu_custom_call.1} parent=1 // pred_fallthru
      _
    // Predicated region
    $region14: #{tpu_custom_call.1} parent=1 // pred_check
      _
    $region15: #{tpu_custom_call.1} parent=1 // pred_check_branch
      %38 = sbr.rel (0) target = $region17
    $region16: #{tpu_custom_call.1} parent=1 // pred_region
      %40 = dma.done [#allocation3], 256
    $region17: #{tpu_custom_call.1} parent=1 // pred_fallthru
      _
    // Predicated region
    $region18: #{tpu_custom_call.1} parent=1 // pred_check
      _
    $region19: #{tpu_custom_call.1} parent=1 // pred_check_branch
      %42 = sbr.rel (0) target = $region21
    $region20: #{tpu_custom_call.1} parent=1 // pred_region
      %44 = dma.done [#allocation6], 4096
    $region21: #{tpu_custom_call.1} parent=1 // pred_fallthru
      _
    %v45 = vld [vmem:[#allocation2] sm:$0xff]
    %v46 = vld [vmem:[#allocation2 + $0x8] sm:$0xff]
    %v47 = vld [vmem:[#allocation5] sm:$0xff]
    %v48 = vld [vmem:[#allocation5 + $0x8] sm:$0xff]
    %v49 = vld [vmem:[#allocation5 + $0x10] sm:$0xff]
    %v50 = vld [vmem:[#allocation5 + $0x18] sm:$0xff]
    %v51 = vld [vmem:[#allocation5 + $0x20] sm:$0xff]
    %v52 = vld [vmem:[#allocation5 + $0x28] sm:$0xff]
    %v53 = vld [vmem:[#allocation5 + $0x30] sm:$0xff]
    %v54 = vld [vmem:[#allocation5 + $0x38] sm:$0xff]
    %v55 = vld [vmem:[#allocation5 + $0x40] sm:$0xff]
    %v56 = vld [vmem:[#allocation5 + $0x48] sm:$0xff]
    %v57 = vld [vmem:[#allocation5 + $0x50] sm:$0xff]
    %v58 = vld [vmem:[#allocation5 + $0x58] sm:$0xff]
    %v59 = vld [vmem:[#allocation5 + $0x60] sm:$0xff]
    %v60 = vld [vmem:[#allocation5 + $0x68] sm:$0xff]
    %v61 = vld [vmem:[#allocation5 + $0x70] sm:$0xff]
    %v62 = vld [vmem:[#allocation5 + $0x78] sm:$0xff]
    %v63 = vld [vmem:[#allocation5 + $0x80] sm:$0xff]
    %v64 = vld [vmem:[#allocation5 + $0x88] sm:$0xff]
    %v65 = vld [vmem:[#allocation5 + $0x90] sm:$0xff]
    %v66 = vld [vmem:[#allocation5 + $0x98] sm:$0xff]
    %v67 = vld [vmem:[#allocation5 + $0xa0] sm:$0xff]
    %v68 = vld [vmem:[#allocation5 + $0xa8] sm:$0xff]
    %v69 = vld [vmem:[#allocation5 + $0xb0] sm:$0xff]
    %v70 = vld [vmem:[#allocation5 + $0xb8] sm:$0xff]
    %v71 = vld [vmem:[#allocation5 + $0xc0] sm:$0xff]
    %v72 = vld [vmem:[#allocation5 + $0xc8] sm:$0xff]
    %v73 = vld [vmem:[#allocation5 + $0xd0] sm:$0xff]
    %v74 = vld [vmem:[#allocation5 + $0xd8] sm:$0xff]
    %v75 = vld [vmem:[#allocation5 + $0xe0] sm:$0xff]
    %v76 = vld [vmem:[#allocation5 + $0xe8] sm:$0xff]
    %v77 = vld [vmem:[#allocation5 + $0xf0] sm:$0xff]
    %v78 = vld [vmem:[#allocation5 + $0xf8] sm:$0xff]
    %v79 = vld [vmem:[%s2] sm:$0x1]
    %v81 = vperm.slane %v79, 0
    %83 = vmatpush.msra.mxu0 %v62
    %84 = vmatpush.msra.mxu0 %v61
    %85 = vmatpush.msra.mxu0 %v60
    %86 = vmatpush.msra.mxu0 %v59
    %87 = vmatpush.msra.mxu0 %v58
    %88 = vmatpush.msra.mxu0 %v57
    %89 = vmatpush.msra.mxu0 %v56
    %90 = vmatpush.msra.mxu0 %v55
    %91 = vmatpush.msra.mxu0 %v54
    %92 = vmatpush.msra.mxu0 %v53
    %93 = vmatpush.msra.mxu0 %v52
    %94 = vmatpush.msra.mxu0 %v51
    %95 = vmatpush.msra.mxu0 %v50
    %96 = vmatpush.msra.mxu0 %v49
    %97 = vmatpush.msra.mxu0 %v48
    %98 = vmatpush.msra.mxu0 %v47
    %99 = vmatmul.f32.gmra.mxu0 %v45
    %v100 = vpop.f32.mrf.mxu0
    %v101 = vadd.f32 %v81, %v100
    %102 = vdwg.mxu0
    %103 = vmatpush.msra.mxu0 %v78
    %104 = vmatpush.msra.mxu0 %v77
    %105 = vmatpush.msra.mxu0 %v76
    %106 = vmatpush.msra.mxu0 %v75
    %107 = vmatpush.msra.mxu0 %v74
    %108 = vmatpush.msra.mxu0 %v73
    %109 = vmatpush.msra.mxu0 %v72
    %110 = vmatpush.msra.mxu0 %v71
    %111 = vmatpush.msra.mxu0 %v70
    %112 = vmatpush.msra.mxu0 %v69
    %113 = vmatpush.msra.mxu0 %v68
    %114 = vmatpush.msra.mxu0 %v67
    %115 = vmatpush.msra.mxu0 %v66
    %116 = vmatpush.msra.mxu0 %v65
    %117 = vmatpush.msra.mxu0 %v64
    %118 = vmatpush.msra.mxu0 %v63
    %119 = vmatmul.f32.gmra.mxu0 %v46
    %v120 = vpop.f32.mrf.mxu0
    %v121 = vadd.f32 %v101, %v120
    %122 = vdwg.mxu0
    %123 = vst [vmem:[#allocation7] sm:$0xff] %v121
    // Predicated region
    $region22: #{tpu_custom_call.1} parent=1 // pred_check
      _
    $region23: #{tpu_custom_call.1} parent=1 // pred_check_branch
      %125 = sbr.rel (0) target = $region25
    $region24: #{tpu_custom_call.1} parent=1 // pred_region
      %127 = vsyncadd [#allocation4], 0
      %s129 = sshll.u32 [#allocation7], 4
      %s130 = int_to_ptr.vmem [resolvable:$true] %s129
      %s131 = sshll.u32 %s3, 4
      %s132 = int_to_ptr.hbm [resolvable:$true] %s131
      %134 = dma.vmem_to_hbm [thread:$0]  %s130, 128, %s132, [#allocation4]
    $region25: #{tpu_custom_call.1} parent=1 // pred_fallthru
      _
    // Predicated region
    $region26: #{tpu_custom_call.1} parent=1 // pred_check
      _
    $region27: #{tpu_custom_call.1} parent=1 // pred_check_branch
      %136 = sbr.rel (0) target = $region29
    $region28: #{tpu_custom_call.1} parent=1 // pred_region
      %138 = dma.done [#allocation4], 128
    $region29: #{tpu_custom_call.1} parent=1 // pred_fallthru
      _
    %139 = vsyncpa [#allocation3], 1
    %140 = vsyncpa [#allocation6], 1
    %141 = vsyncpa [#allocation4], 1

</llo_original>
